<compile_context>
chip_gen: v6e
topology: v6e:2x2x1
jax: 0.10.0
libtpu: 0.0.40
codegen_flags: <defaults>
</compile_context>

<pallas_src>
import functools

import jax
import jax.numpy as jnp
from jax.experimental import pallas as pl
from jax.experimental.pallas import tpu as pltpu

KH = KW = 3          # kernel_size=3
PAD = 1              # padding=1 (stride=1, groups=1)
BN_EPS = 1e-5
LRELU_SLOPE = 0.01   # nn.LeakyReLU default


def _make_conv_stats_kernel(row_stride, out_rows):
    """Builds the per-tile kernel.

    row_stride = W (image width): flattened-row offset between successive kh taps.
    out_rows   = tile_h * W     : number of output pixels produced per tile.
    """

    def kernel(x_ref, w_ref, conv_ref, stats_ref):
        # x_ref:    (1, (tile_h+2)*W, 3*Cin) bf16 -- row tile with a 2-row halo,
        #                                            kw taps pre-concatenated on channels
        # w_ref:    (3, 3*Cin, Cout)         bf16 -- one (3*Cin, Cout) slab per kh tap
        # conv_ref: (1, tile_h*W, Cout)      bf16 -- conv output tile (un-padded Cout)
        # stats_ref:(1, 2, Cout)             f32  -- per-tile [channel sum, channel sum sq]
        acc = None
        for kh in range(KH):  # 3 accumulating MXU matmuls, K = 3*Cin, f32 accumulation
            lhs = x_ref[0, kh * row_stride: kh * row_stride + out_rows, :]
            d = jnp.dot(lhs, w_ref[kh], preferred_element_type=jnp.float32)
            acc = d if acc is None else acc + d
        # bf16 store of the conv tile (stats below come from the f32 acc in-register).
        conv_ref[0] = acc.astype(conv_ref.dtype)
        # Write the two stats rows directly (no concatenate / extra VMEM materialization).
        stats_ref[0, 0:1, :] = jnp.sum(acc, axis=0, keepdims=True)
        stats_ref[0, 1:2, :] = jnp.sum(acc * acc, axis=0, keepdims=True)

    return kernel


def _spectral_normalize(weight, u):
    # weight: (Cout, Cin, KH, KW) ; u: (Cout,)
    # One power iteration (torch.nn.utils.spectral_norm default), sigma = u^T W v.
    w_mat = weight.reshape(weight.shape[0], -1)

    def l2n(v):
        return v / (jnp.linalg.norm(v) + 1e-12)

    v = l2n(w_mat.T @ u)
    u_new = l2n(w_mat @ v)
    sigma = u_new @ (w_mat @ v)
    return weight / sigma, u_new


@functools.partial(jax.jit, static_argnames=("target_rows",))
def cba_forward(x_nchw, weight, bias, gamma, beta, u, *, target_rows=2048):
    # x_nchw: (N, Cin, H, W). Returns (out_nchw, updated_u).
    del bias  # exactly cancelled by train-mode BatchNorm's batch-mean subtraction
    N, Cin, H, W = x_nchw.shape
    Cout = weight.shape[0]
    C3 = KW * Cin                      # kw-concatenated channel width (3*Cin)

    # Tile height: target ~target_rows output pixels per grid step, clamped to H.
    tile_h = max(1, min(H, target_rows // max(W, 1)))
    T = -(-H // tile_h)                # tiles per image (cdiv)
    H_pad = T * tile_h
    Lp = (tile_h + 2) * W              # flattened input rows per tile (incl. 2-row halo)
    out_rows = tile_h * W              # flattened output rows per tile
    NT = N * T
    R = N * H * W                      # true pixel count for the BN statistics

    # --- glue: spectral norm + weight layout (kh-major, then kw, then cin) --------------
    w_sn, u_new = _spectral_normalize(weight, u)
    # (Cout, Cin, kh, kw) -> (kh, kw, cin, cout) -> (kh, kw*Cin + cin, cout)
    w_k = jnp.transpose(w_sn, (2, 3, 1, 0)).reshape(KH, C3, Cout).astype(jnp.bfloat16)

    # --- glue: NCHW -> NHWC bf16, spatial pad, kw-tap concat, overlapping row tiles ------
    x_nhwc = jnp.transpose(x_nchw, (0, 2, 3, 1)).astype(jnp.bfloat16)
    # pad: 1 row top, (H_pad - H + 1) rows bottom (zero rows -> zero conv rows, no bias),
    #      1 col left/right.
    x_p = jnp.pad(x_nhwc, ((0, 0), (PAD, H_pad - H + PAD), (PAD, PAD), (0, 0)))
    # kw taps concatenated on channels: (N, H_pad+2, W, 3*Cin)
    x_kw = jnp.concatenate([x_p[:, :, kw:kw + W, :] for kw in range(KW)], axis=-1)
    # overlapping row tiles (+2 halo rows): (N, T, tile_h+2, W, 3*Cin)
    ridx = jnp.arange(T)[:, None] * tile_h + jnp.arange(tile_h + 2)[None, :]
    x_tiles = x_kw[:, ridx].reshape(NT, Lp, C3)

    # --- Pallas: conv (3 accumulating MXU matmuls per tile) + per-tile BN partial stats --
    conv_flat, stats = pl.pallas_call(
        _make_conv_stats_kernel(W, out_rows),
        out_shape=(jax.ShapeDtypeStruct((NT, out_rows, Cout), jnp.bfloat16),
                   jax.ShapeDtypeStruct((NT, 2, Cout), jnp.float32)),
        grid=(NT,),
        in_specs=[
            pl.BlockSpec((1, Lp, C3), lambda i: (i, 0, 0)),
            pl.BlockSpec((KH, C3, Cout), lambda i: (0, 0, 0)),  # weight resident
        ],
        out_specs=(
            pl.BlockSpec((1, out_rows, Cout), lambda i: (i, 0, 0)),
            pl.BlockSpec((1, 2, Cout), lambda i: (i, 0, 0)),
        ),
        compiler_params=pltpu.CompilerParams(
            # "parallel" lets multi-TC parts (v7x) split the row-tile axis; it is a no-op
            # on single-TC v5e/v6e.  TODO(synk): confirm v7x core-sharding in xprof;
            # switch to pltpu.CORE_PARALLEL if both TCs are not active.
            dimension_semantics=("parallel",),
            vmem_limit_bytes=32 * 1024 * 1024),
    )(x_tiles, w_k)

    # --- glue: finalize train-mode BN stats (biased var) and fold the affine -------------
    # Padded rows beyond H are all-zero inputs -> zero conv rows -> contribute 0 to both
    # partial sums, so dividing by the true R is exact.
    # NOTE: E[x^2]-E[x]^2 in f32 can cancel for |mean| >> std at very large R; per-tile
    # partials keep it benign here.
    sums = jnp.sum(stats[:, 0, :], axis=0)
    sqs = jnp.sum(stats[:, 1, :], axis=0)
    mean = sums / R
    var = jnp.maximum(sqs / R - mean * mean, 0.0)
    scale = gamma.astype(jnp.float32) * jax.lax.rsqrt(var + BN_EPS)
    shift = beta.astype(jnp.float32) - mean * scale

    # --- epilogue in plain JAX: XLA fuses the FMA + LeakyReLU with the slice/transpose ---
    conv = conv_flat.reshape(N, H_pad, W, Cout)[:, :H]
    y = conv.astype(jnp.float32) * scale + shift
    y = jnp.where(y >= 0.0, y, LRELU_SLOPE * y)
    return jnp.transpose(y, (0, 3, 1, 2)), u_new


def _reference(x, weight, bias, gamma, beta, u):
    # Pure-JAX f32 reference (includes the conv bias to demonstrate the BN cancellation).
    w_sn, _ = _spectral_normalize(weight, u)
    y = jax.lax.conv_general_dilated(
        x, w_sn, window_strides=(1, 1), padding=((PAD, PAD), (PAD, PAD)),
        dimension_numbers=("NCHW", "OIHW", "NCHW"))
    y = y + bias.reshape(1, -1, 1, 1)
    mean = jnp.mean(y, axis=(0, 2, 3), keepdims=True)
    var = jnp.mean((y - mean) ** 2, axis=(0, 2, 3), keepdims=True)
    yn = (y - mean) * jax.lax.rsqrt(var + BN_EPS)
    yn = yn * gamma.reshape(1, -1, 1, 1) + beta.reshape(1, -1, 1, 1)
    return jnp.where(yn >= 0.0, yn, LRELU_SLOPE * yn)


if __name__ == "__main__":
    key = jax.random.PRNGKey(0)
    k_x, k_w, k_b, k_u = jax.random.split(key, 4)

    N, Cin, Cout, H, W = 2, 16, 16, 16, 16   # module defaults: in=out=16 channels

    x = jax.random.normal(k_x, (N, Cin, H, W), dtype=jnp.float32)

    fan_in = Cin * KH * KW
    bound = 1.0 / (fan_in ** 0.5)
    weight = jax.random.uniform(k_w, (Cout, Cin, KH, KW),
                                minval=-bound, maxval=bound, dtype=jnp.float32)
    bias = jax.random.uniform(k_b, (Cout,),
                              minval=-bound, maxval=bound, dtype=jnp.float32)
    gamma = jnp.ones((Cout,), jnp.float32)     # BatchNorm2d default affine init
    beta = jnp.zeros((Cout,), jnp.float32)
    u0 = jax.random.normal(k_u, (Cout,), dtype=jnp.float32)
    u0 = u0 / (jnp.linalg.norm(u0) + 1e-12)    # spectral_norm 'u' buffer

    out, u_new = cba_forward(x, weight, bias, gamma, beta, u0)
    jax.block_until_ready(out)
    assert out.shape == (N, Cout, H, W)

    ref = _reference(x, weight, bias, gamma, beta, u0)
    max_err = float(jnp.max(jnp.abs(out - ref)))
    # loose tolerance: matmul operands and the stored conv tile are bf16 (f32 accumulate);
    # BN-normalized outputs are O(1)
    assert max_err < 0.15, f"max |err| vs f32 reference = {max_err}"

    print("KERNEL_OK")
</pallas_src>

<mosaic_0001>
module attributes {stable_mosaic.version = 11 : i64} {
  func.func @kernel(%arg0: i32, %arg1: memref<1x288x48xbf16, #tpu.memory_space<vmem>>, %arg2: memref<3x48x16xbf16, #tpu.memory_space<vmem>>, %arg3: memref<1x256x16xbf16, #tpu.memory_space<vmem>>, %arg4: memref<1x2x16xf32, #tpu.memory_space<vmem>>) attributes {dimension_semantics = [#tpu.dimension_semantics<parallel>], iteration_bounds = array<i64: 2>, scalar_prefetch = 0 : i64, scratch_operands = 0 : i64, tpu.core_type = #tpu.core_type<tc>, window_params = [{transform_indices = @transform_0, window_bounds = array<i64: 1, 288, 48>}, {pipeline_mode = #tpu.pipeline_mode<synchronous>, transform_indices = @transform_1, window_bounds = array<i64: 3, 48, 16>}, {transform_indices = @transform_2, window_bounds = array<i64: 1, 256, 16>}, {transform_indices = @transform_3, window_bounds = array<i64: 1, 2, 16>}]} {
    %c0 = arith.constant 0 : index
    %c0_0 = arith.constant 0 : index
    %c0_1 = arith.constant 0 : index
    %0 = vector.load %arg1[%c0, %c0_0, %c0_1] : memref<1x288x48xbf16, #tpu.memory_space<vmem>>, vector<1x256x48xbf16>
    %1 = vector.shape_cast %0 : vector<1x256x48xbf16> to vector<256x48xbf16>
    %c0_2 = arith.constant 0 : index
    %c0_3 = arith.constant 0 : index
    %c0_4 = arith.constant 0 : index
    %2 = vector.load %arg2[%c0_2, %c0_3, %c0_4] : memref<3x48x16xbf16, #tpu.memory_space<vmem>>, vector<1x48x16xbf16>
    %3 = vector.shape_cast %2 : vector<1x48x16xbf16> to vector<48x16xbf16>
    %cst = arith.constant dense<0.000000e+00> : vector<256x16xf32>
    %4 = tpu.matmul %1, %3, %cst {dimension_numbers = #tpu.dot_dimension_numbers<[1], [0], [0], [1], [0, 0, 1, 1], [], []>} : vector<256x48xbf16>, vector<48x16xbf16>, vector<256x16xf32> -> vector<256x16xf32>
    %c0_5 = arith.constant 0 : index
    %c16 = arith.constant 16 : index
    %c0_6 = arith.constant 0 : index
    %5 = vector.load %arg1[%c0_5, %c16, %c0_6] : memref<1x288x48xbf16, #tpu.memory_space<vmem>>, vector<1x256x48xbf16>
    %6 = vector.shape_cast %5 : vector<1x256x48xbf16> to vector<256x48xbf16>
    %c1 = arith.constant 1 : index
    %c0_7 = arith.constant 0 : index
    %c0_8 = arith.constant 0 : index
    %7 = vector.load %arg2[%c1, %c0_7, %c0_8] : memref<3x48x16xbf16, #tpu.memory_space<vmem>>, vector<1x48x16xbf16>
    %8 = vector.shape_cast %7 : vector<1x48x16xbf16> to vector<48x16xbf16>
    %cst_9 = arith.constant dense<0.000000e+00> : vector<256x16xf32>
    %9 = tpu.matmul %6, %8, %cst_9 {dimension_numbers = #tpu.dot_dimension_numbers<[1], [0], [0], [1], [0, 0, 1, 1], [], []>} : vector<256x48xbf16>, vector<48x16xbf16>, vector<256x16xf32> -> vector<256x16xf32>
    %10 = arith.addf %4, %9 : vector<256x16xf32>
    %c0_10 = arith.constant 0 : index
    %c32 = arith.constant 32 : index
    %c0_11 = arith.constant 0 : index
    %11 = vector.load %arg1[%c0_10, %c32, %c0_11] : memref<1x288x48xbf16, #tpu.memory_space<vmem>>, vector<1x256x48xbf16>
    %12 = vector.shape_cast %11 : vector<1x256x48xbf16> to vector<256x48xbf16>
    %c2 = arith.constant 2 : index
    %c0_12 = arith.constant 0 : index
    %c0_13 = arith.constant 0 : index
    %13 = vector.load %arg2[%c2, %c0_12, %c0_13] : memref<3x48x16xbf16, #tpu.memory_space<vmem>>, vector<1x48x16xbf16>
    %14 = vector.shape_cast %13 : vector<1x48x16xbf16> to vector<48x16xbf16>
    %cst_14 = arith.constant dense<0.000000e+00> : vector<256x16xf32>
    %15 = tpu.matmul %12, %14, %cst_14 {dimension_numbers = #tpu.dot_dimension_numbers<[1], [0], [0], [1], [0, 0, 1, 1], [], []>} : vector<256x48xbf16>, vector<48x16xbf16>, vector<256x16xf32> -> vector<256x16xf32>
    %16 = arith.addf %10, %15 : vector<256x16xf32>
    %17 = arith.truncf %16 : vector<256x16xf32> to vector<256x16xbf16>
    %c0_15 = arith.constant 0 : index
    %c0_16 = arith.constant 0 : index
    %c0_17 = arith.constant 0 : index
    %18 = vector.load %arg3[%c0_15, %c0_16, %c0_17] : memref<1x256x16xbf16, #tpu.memory_space<vmem>>, vector<1x256x16xbf16>
    %19 = vector.shape_cast %18 : vector<1x256x16xbf16> to vector<256x16xbf16>
    %20 = vector.shape_cast %17 : vector<256x16xbf16> to vector<1x256x16xbf16>
    tpu.vector_store %arg3[%c0_15, %c0_16, %c0_17], %20 {strides = array<i32>} : memref<1x256x16xbf16, #tpu.memory_space<vmem>>, vector<1x256x16xbf16>,
    %cst_18 = arith.constant dense<0.000000e+00> : vector<16xf32>
    %21 = vector.multi_reduction <add>, %16, %cst_18 [0] : vector<256x16xf32> to vector<16xf32>
    %22 = vector.shape_cast %21 : vector<16xf32> to vector<1x16xf32>
    %c0_19 = arith.constant 0 : index
    %c0_20 = arith.constant 0 : index
    %c0_21 = arith.constant 0 : index
    %23 = vector.load %arg4[%c0_19, %c0_20, %c0_21] : memref<1x2x16xf32, #tpu.memory_space<vmem>>, vector<1x1x16xf32>
    %24 = vector.shape_cast %23 : vector<1x1x16xf32> to vector<1x16xf32>
    %25 = vector.shape_cast %22 : vector<1x16xf32> to vector<1x1x16xf32>
    tpu.vector_store %arg4[%c0_19, %c0_20, %c0_21], %25 {strides = array<i32>} : memref<1x2x16xf32, #tpu.memory_space<vmem>>, vector<1x1x16xf32>,
    %26 = arith.mulf %16, %16 : vector<256x16xf32>
    %cst_22 = arith.constant dense<0.000000e+00> : vector<16xf32>
    %27 = vector.multi_reduction <add>, %26, %cst_22 [0] : vector<256x16xf32> to vector<16xf32>
    %28 = vector.shape_cast %27 : vector<16xf32> to vector<1x16xf32>
    %c0_23 = arith.constant 0 : index
    %c1_24 = arith.constant 1 : index
    %c0_25 = arith.constant 0 : index
    %29 = vector.load %arg4[%c0_23, %c1_24, %c0_25] : memref<1x2x16xf32, #tpu.memory_space<vmem>>, vector<1x1x16xf32>
    %30 = vector.shape_cast %29 : vector<1x1x16xf32> to vector<1x16xf32>
    %31 = vector.shape_cast %28 : vector<1x16xf32> to vector<1x1x16xf32>
    tpu.vector_store %arg4[%c0_23, %c1_24, %c0_25], %31 {strides = array<i32>} : memref<1x2x16xf32, #tpu.memory_space<vmem>>, vector<1x1x16xf32>,
    return
  }
  func.func @transform_0(%arg0: i32) -> (i32, i32, i32) {
    %c0_i32 = arith.constant 0 : i32
    %c0_i32_0 = arith.constant 0 : i32
    %c0_i32_1 = arith.constant 0 : i32
    return %arg0, %c0_i32, %c0_i32_0 : i32, i32, i32
  }
  func.func @transform_1(%arg0: i32) -> (i32, i32, i32) {
    %c0_i32 = arith.constant 0 : i32
    %c0_i32_0 = arith.constant 0 : i32
    %c0_i32_1 = arith.constant 0 : i32
    %c0_i32_2 = arith.constant 0 : i32
    return %c0_i32, %c0_i32_0, %c0_i32_1 : i32, i32, i32
  }
  func.func @transform_2(%arg0: i32) -> (i32, i32, i32) {
    %c0_i32 = arith.constant 0 : i32
    %c0_i32_0 = arith.constant 0 : i32
    %c0_i32_1 = arith.constant 0 : i32
    return %arg0, %c0_i32, %c0_i32_0 : i32, i32, i32
  }
  func.func @transform_3(%arg0: i32) -> (i32, i32, i32) {
    %c0_i32 = arith.constant 0 : i32
    %c0_i32_0 = arith.constant 0 : i32
    %c0_i32_1 = arith.constant 0 : i32
    return %arg0, %c0_i32, %c0_i32_0 : i32, i32, i32
  }
}

</mosaic_0001>

<llo_original>
// kernel: cba_forward.1
$region0: #{cba_forward.1}
  #allocation0 [shape = 'u32[]', space=smem, size = 0x4, offset = 0x4, fixed_abs, tag = 'smem constant byte address 0x4 - core index']
  #allocation1 [shape = 'u32[144,128]{1,0:T(1,128)}', space=vmem, size = 0x12000, scoped, tag = 'internal scratch']
  %s0 = inlined_call_operand.vmem [shape: bf16[2,288,48], index: 0, kind: input, shape index: {}]
  %s1 = inlined_call_operand.vmem [shape: bf16[3,48,16], index: 1, kind: input, shape index: {}]
  %s2 = inlined_call_operand.vmem [shape: bf16[2,256,16], index: 2, kind: output, shape index: {0}]
  %s3 = inlined_call_operand.vmem [shape: f32[2,2,16], index: 3, kind: output, shape index: {1}]
  %4 = xla_tuple %s2, %s3
  %s5 = sld [smem:[#allocation0]]
  $region49: #{cba_forward.1} parent=0
    _
  %s7 = ssub.s32 1, %s5
  %s8 = scalar_select 0, %s7, %s5
  loop: start=0, step=1, limit=4
  $region2: #{cba_forward.1} parent=0 // loop_pre_header
    _
  $region3: #{cba_forward.1} parent=0 // loop_header
    %s10 = sphi 0, %s14
    %p11 = scmp.ge.s32.totalorder %s10, 4
    %s20 = sphi 0, %s22
    %s23 = sphi 0, %s20
    %s24 = sphi 0, %s23
    %s40 = sphi 0, %s24
    %s44 = sphi 0, %s44
    %s46 = sphi 0, %s44
    %s47 = sphi 0, %s46
    %s61 = sphi 0, %s47
    %s67 = sphi 0, %s69
    %s70 = sphi 0, %s67
    %s71 = sphi 0, %s70
    %s87 = sphi 0, %s71
    %s93 = sphi 0, %s95
    %s96 = sphi 0, %s93
    %s97 = sphi 0, %s96
    %s113 = sphi 0, %s97
  $region4: #{cba_forward.1} parent=0 // loop_header_branch
    %13 = sbr.rel (%p11) target = $region8
  $region5: #{cba_forward.1} parent=0 // loop_body
    %s15 = ssub.s32 %s10, 1
    %s16 = ssub.s32 %s10, 2
    %s17 = sadd.s32 %s10, 1
    %s18 = ssub.s32 %s10, %s17
    %p19 = scmp.eq.s32.totalorder %s18, 0
    %s21 = sadd.s32 %s20, 1
    %s22 = scalar_select %p19, %s20, %s21
    %p25 = pneg %p19
    %p26 = scmp.eq.s32.totalorder %s10, 1
    %p27 = por %p25, %p26
    %p28 = scmp.ne.s32.totalorder %s20, %s23
    %p29 = scmp.eq.s32.totalorder %s10, 0
    %p30 = por %p28, %p29
    %p31 = scmp.ne.s32.totalorder %s20, %s23
    %p32 = scmp.eq.s32.totalorder %s15, 1
    %p33 = por %p31, %p32
    %p34 = scmp.ne.s32.totalorder %s23, %s24
    %p35 = scmp.eq.s32.totalorder %s15, 0
    %p36 = por %p34, %p35
    %p37 = scmp.ne.s32.totalorder %s23, %s24
    %p38 = scmp.eq.s32.totalorder %s16, 1
    %p39 = por %p37, %p38
    %p41 = scmp.ne.s32.totalorder %s24, %s40
    %p42 = scmp.eq.s32.totalorder %s16, 0
    %p43 = por %p41, %p42
    %s45 = sadd.s32 %s44, 1
    %p48 = scmp.eq.s32.totalorder %s10, 1
    %p49 = scmp.ne.s32.totalorder %s44, %s46
    %p50 = scmp.eq.s32.totalorder %s10, 0
    %p51 = por %p49, %p50
    %p52 = scmp.ne.s32.totalorder %s44, %s46
    %p53 = scmp.eq.s32.totalorder %s15, 1
    %p54 = por %p52, %p53
    %p55 = scmp.ne.s32.totalorder %s46, %s47
    %p56 = scmp.eq.s32.totalorder %s15, 0
    %p57 = por %p55, %p56
    %p58 = scmp.ne.s32.totalorder %s46, %s47
    %p59 = scmp.eq.s32.totalorder %s16, 1
    %p60 = por %p58, %p59
    %p62 = scmp.ne.s32.totalorder %s47, %s61
    %p63 = scmp.eq.s32.totalorder %s16, 0
    %p64 = por %p62, %p63
    %s65 = ssub.s32 %s10, %s17
    %p66 = scmp.eq.s32.totalorder %s65, 0
    %s68 = sadd.s32 %s67, 1
    %s69 = scalar_select %p66, %s67, %s68
    %p72 = pneg %p66
    %p73 = scmp.eq.s32.totalorder %s10, 1
    %p74 = por %p72, %p73
    %p75 = scmp.ne.s32.totalorder %s67, %s70
    %p76 = scmp.eq.s32.totalorder %s10, 0
    %p77 = por %p75, %p76
    %p78 = scmp.ne.s32.totalorder %s67, %s70
    %p79 = scmp.eq.s32.totalorder %s15, 1
    %p80 = por %p78, %p79
    %p81 = scmp.ne.s32.totalorder %s70, %s71
    %p82 = scmp.eq.s32.totalorder %s15, 0
    %p83 = por %p81, %p82
    %p84 = scmp.ne.s32.totalorder %s70, %s71
    %p85 = scmp.eq.s32.totalorder %s16, 1
    %p86 = por %p84, %p85
    %p88 = scmp.ne.s32.totalorder %s71, %s87
    %p89 = scmp.eq.s32.totalorder %s16, 0
    %p90 = por %p88, %p89
    %s91 = ssub.s32 %s10, %s17
    %p92 = scmp.eq.s32.totalorder %s91, 0
    %s94 = sadd.s32 %s93, 1
    %s95 = scalar_select %p92, %s93, %s94
    %p98 = pneg %p92
    %p99 = scmp.eq.s32.totalorder %s10, 1
    %p100 = por %p98, %p99
    %p101 = scmp.ne.s32.totalorder %s93, %s96
    %p102 = scmp.eq.s32.totalorder %s10, 0
    %p103 = por %p101, %p102
    %p104 = scmp.ne.s32.totalorder %s93, %s96
    %p105 = scmp.eq.s32.totalorder %s15, 1
    %p106 = por %p104, %p105
    %p107 = scmp.ne.s32.totalorder %s96, %s97
    %p108 = scmp.eq.s32.totalorder %s15, 0
    %p109 = por %p107, %p108
    %p110 = scmp.ne.s32.totalorder %s96, %s97
    %p111 = scmp.eq.s32.totalorder %s16, 1
    %p112 = por %p110, %p111
    %p114 = scmp.ne.s32.totalorder %s97, %s113
    %p115 = scmp.eq.s32.totalorder %s16, 0
    %p116 = por %p114, %p115
    %p117 = scmp.le.s32.totalorder 1, %s10
    %p118 = scmp.lt.s32.totalorder %s10, 3
    %p119 = pnand %p117, %p118
    %p120 = pneg %p119
    // Predicated region
    $region9: #{cba_forward.1} parent=5 // pred_check
      _
    $region10: #{cba_forward.1} parent=5 // pred_check_branch
      %122 = sbr.rel (%p119) target = $region12
    $region11: #{cba_forward.1} parent=5 // pred_region
      %s123 = ssub.s32 %s10, 1
      // Predicated region
      $region13: #{cba_forward.1} parent=11 // pred_check
        %p124 = pneg %p57
      $region14: #{cba_forward.1} parent=11 // pred_check_branch
        %126 = sbr.rel (%p124) target = $region16
      $region15: #{cba_forward.1} parent=11 // pred_region
        _
      $region16: #{cba_forward.1} parent=11 // pred_fallthru
        _
    $region12: #{cba_forward.1} parent=5 // pred_fallthru
      _
    %p127 = scmp.lt.s32.totalorder %s10, 2
    // Predicated region
    $region17: #{cba_forward.1} parent=5 // pred_check
      %p128 = pneg %p127
    $region18: #{cba_forward.1} parent=5 // pred_check_branch
      %130 = sbr.rel (%p128) target = $region20
    $region19: #{cba_forward.1} parent=5 // pred_region
      // Predicated region
      $region21: #{cba_forward.1} parent=19 // pred_check
        %p131 = pneg %p30
      $region22: #{cba_forward.1} parent=19 // pred_check_branch
        %133 = sbr.rel (%p131) target = $region24
      $region23: #{cba_forward.1} parent=19 // pred_region
        %p134 = scmp.lt.s32.totalorder %s10, 1
        %s135 = scalar_select %p134, %s10, 1
        %s136 = smul.addr %s135, 36
        %s137 = smul.addr %s136, 4
        %s138 = scalar_lea.vmem %s0, %s137
      $region24: #{cba_forward.1} parent=19 // pred_fallthru
        _
    $region20: #{cba_forward.1} parent=5 // pred_fallthru
      _
    %p139 = scmp.le.s32.totalorder 1, %s10
    %p140 = scmp.lt.s32.totalorder %s10, 3
    %p141 = pnand %p139, %p140
    %p142 = pneg %p141
    // Predicated region
    $region25: #{cba_forward.1} parent=5 // pred_check
      _
    $region26: #{cba_forward.1} parent=5 // pred_check_branch
      %144 = sbr.rel (%p141) target = $region28
    $region27: #{cba_forward.1} parent=5 // pred_region
      %s145 = ssub.s32 %s10, 1
      %p146 = scmp.lt.s32.totalorder %s15, 1
      %s147 = scalar_select %p146, %s15, 1
      %s148 = smul.addr %s147, 36
      %s149 = smul.addr %s148, 4
      %s150 = scalar_lea.vmem %s0, %s149
      %p151 = pneg %p36
      %p152 = pneg %p33
      %p153 = pneg %p57
      %p154 = pneg %p54
      %p155 = pneg %p83
      %p156 = pneg %p80
      %p157 = scmp.lt.s32.totalorder %s15, 1
      %s158 = scalar_select %p157, %s15, 1
      %s159 = smul.addr %s158, 32
      %s160 = smul.addr %s159, 4
      %s161 = scalar_lea.vmem %s2, %s160
      %p162 = pneg %p109
      %p163 = pneg %p106
      %p164 = scmp.lt.s32.totalorder %s15, 1
      %s165 = scalar_select %p164, %s15, 1
      %s166 = smul.addr %s165, 2
      %s167 = scalar_lea.vmem %s3, %s166
      %p168 = scmp.lt.s32.totalorder %s15, 1
      %s169 = scalar_select %p168, %s15, 1
      %s170 = smul.addr %s169, 36
      %s171 = smul.addr %s170, 4
      %s172 = scalar_lea.vmem %s0, %s171
      %p173 = scmp.lt.s32.totalorder %s15, 1
      %s174 = scalar_select %p173, %s15, 1
      %s175 = smul.addr %s174, 32
      %s176 = smul.addr %s175, 4
      %s177 = scalar_lea.vmem %s2, %s176
      %p178 = scmp.lt.s32.totalorder %s15, 1
      %s179 = scalar_select %p178, %s15, 1
      %s180 = smul.addr %s179, 2
      %s181 = scalar_lea.vmem %s3, %s180
      %v183 = vld [vmem:[%s172] sm:$0xf]
      %v184 = vld [vmem:[%s172 + $0x4] sm:$0xf]
      %v185 = vld [vmem:[%s172 + $0x8] sm:$0xf]
      %v186 = vld [vmem:[%s172 + $0xc] sm:$0xf]
      %v187 = vld [vmem:[%s172 + $0x10] sm:$0xf]
      %v188 = vld [vmem:[%s172 + $0x14] sm:$0xf]
      %v189 = vld [vmem:[%s172 + $0x18] sm:$0xf]
      %v190 = vld [vmem:[%s172 + $0x1c] sm:$0xf]
      %v191 = vld [vmem:[%s172 + $0x20] sm:$0xf]
      %v192 = vld [vmem:[%s172 + $0x24] sm:$0xf]
      %v193 = vld [vmem:[%s172 + $0x28] sm:$0xf]
      %v194 = vld [vmem:[%s172 + $0x2c] sm:$0xf]
      %v195 = vld [vmem:[%s172 + $0x30] sm:$0xf]
      %v196 = vld [vmem:[%s172 + $0x34] sm:$0xf]
      %v197 = vld [vmem:[%s172 + $0x38] sm:$0xf]
      %v198 = vld [vmem:[%s172 + $0x3c] sm:$0xf]
      %v199 = vld [vmem:[%s172 + $0x40] sm:$0xf]
      %v200 = vld [vmem:[%s172 + $0x44] sm:$0xf]
      %v201 = vld [vmem:[%s172 + $0x48] sm:$0xf]
      %v202 = vld [vmem:[%s172 + $0x4c] sm:$0xf]
      %v203 = vld [vmem:[%s172 + $0x50] sm:$0xf]
      %v204 = vld [vmem:[%s172 + $0x54] sm:$0xf]
      %v205 = vld [vmem:[%s172 + $0x58] sm:$0xf]
      %v206 = vld [vmem:[%s172 + $0x5c] sm:$0xf]
      %v207 = vld [vmem:[%s172 + $0x60] sm:$0xf]
      %v208 = vld [vmem:[%s172 + $0x64] sm:$0xf]
      %v209 = vld [vmem:[%s172 + $0x68] sm:$0xf]
      %v210 = vld [vmem:[%s172 + $0x6c] sm:$0xf]
      %v211 = vld [vmem:[%s172 + $0x70] sm:$0xf]
      %v212 = vld [vmem:[%s172 + $0x74] sm:$0xf]
      %v213 = vld [vmem:[%s172 + $0x78] sm:$0xf]
      %v214 = vld [vmem:[%s172 + $0x7c] sm:$0xf]
      %v215 = vld [vmem:[%s1] sm:$0xf]
      %v216 = vld [vmem:[%s1 + $0x4] sm:$0xf]
      %v217 = vld [vmem:[%s1 + $0x8] sm:$0xf]
      %v218 = vld [vmem:[%s1 + $0xc] sm:$0xf]
      %v219 = vld [vmem:[%s1 + $0x10] sm:$0xf]
      %v220 = vld [vmem:[%s1 + $0x14] sm:$0xf]
      %v221 = vld [vmem:[%s172 + $0x80] sm:$0xf]
      %v222 = vld [vmem:[%s172 + $0x84] sm:$0xf]
      %s223 = scalar_lea.vmem %s1, 24
      %v224 = vld [vmem:[%s223] sm:$0xf]
      %v225 = vld [vmem:[%s223 + $0x4] sm:$0xf]
      %v226 = vld [vmem:[%s223 + $0x8] sm:$0xf]
      %v227 = vld [vmem:[%s223 + $0xc] sm:$0xf]
      %v228 = vld [vmem:[%s223 + $0x10] sm:$0xf]
      %v229 = vld [vmem:[%s223 + $0x14] sm:$0xf]
      %v262 = vunpack.c.l.b16 %v185
      %v263 = vunpack.c.l.b16 %v186
      %v264 = vunpack.c.l.b16 %v187
      %v265 = vunpack.c.l.b16 %v188
      %v266 = vunpack.c.l.b16 %v189
      %v267 = vunpack.c.l.b16 %v190
      %v268 = vunpack.c.l.b16 %v191
      %v269 = vunpack.c.l.b16 %v192
      %v270 = vunpack.c.l.b16 %v193
      %v271 = vunpack.c.l.b16 %v194
      %v272 = vunpack.c.l.b16 %v195
      %v273 = vunpack.c.l.b16 %v196
      %v274 = vunpack.c.l.b16 %v197
      %v275 = vunpack.c.l.b16 %v198
      %v276 = vunpack.c.l.b16 %v199
      %v277 = vunpack.c.l.b16 %v200
      %v278 = vunpack.c.l.b16 %v201
      %v279 = vunpack.c.l.b16 %v202
      %v280 = vunpack.c.l.b16 %v203
      %v281 = vunpack.c.l.b16 %v204
      %v282 = vunpack.c.l.b16 %v205
      %v283 = vunpack.c.l.b16 %v206
      %v284 = vunpack.c.l.b16 %v207
      %v285 = vunpack.c.l.b16 %v208
      %v286 = vunpack.c.l.b16 %v209
      %v287 = vunpack.c.l.b16 %v210
      %v288 = vunpack.c.l.b16 %v211
      %v289 = vunpack.c.l.b16 %v212
      %v290 = vunpack.c.l.b16 %v213
      %v291 = vunpack.c.l.b16 %v214
      %v292 = vunpack.c.l.b16 %v221
      %v293 = vunpack.c.l.b16 %v222
      %v294 = vpack.c.b16 %v263, %v262
      %v295 = vpack.c.b16 %v265, %v264
      %v296 = vpack.c.b16 %v267, %v266
      %v297 = vpack.c.b16 %v269, %v268
      %v298 = vpack.c.b16 %v271, %v270
      %v299 = vpack.c.b16 %v273, %v272
      %v300 = vpack.c.b16 %v275, %v274
      %v301 = vpack.c.b16 %v277, %v276
      %v302 = vpack.c.b16 %v279, %v278
      %v303 = vpack.c.b16 %v281, %v280
      %v304 = vpack.c.b16 %v283, %v282
      %v305 = vpack.c.b16 %v285, %v284
      %v306 = vpack.c.b16 %v287, %v286
      %v307 = vpack.c.b16 %v289, %v288
      %v308 = vpack.c.b16 %v291, %v290
      %v309 = vpack.c.b16 %v293, %v292
      %v316 = vunpack.c.l.b16 %v224
      %v317 = vunpack.c.l.b16 %v225
      %v318 = vunpack.c.l.b16 %v226
      %v319 = vunpack.c.l.b16 %v227
      %v320 = vunpack.c.l.b16 %v228
      %v321 = vunpack.c.l.b16 %v229
      %v322 = vpack.c.b16 %v317, %v316
      %v323 = vpack.c.b16 %v319, %v318
      %v324 = vpack.c.b16 %v321, %v320
      %vm328 = vcmask 392192
      %v330 = vsel %vm328, %v294, 0
      %v333 = vsel %vm328, %v295, 0
      %v336 = vsel %vm328, %v296, 0
      %v339 = vsel %vm328, %v297, 0
      %v342 = vsel %vm328, %v298, 0
      %v345 = vsel %vm328, %v299, 0
      %v348 = vsel %vm328, %v300, 0
      %v351 = vsel %vm328, %v301, 0
      %v354 = vsel %vm328, %v302, 0
      %v357 = vsel %vm328, %v303, 0
      %v360 = vsel %vm328, %v304, 0
      %v363 = vsel %vm328, %v305, 0
      %v366 = vsel %vm328, %v306, 0
      %v369 = vsel %vm328, %v307, 0
      %v372 = vsel %vm328, %v308, 0
      %v375 = vsel %vm328, %v309, 0
      %377 = vmatprep.subr.bf16.mxu0 0
      %378 = vmatpush1.bf16.msra.mxu0 0
      %379 = vmatprep.subr.bf16.mxu0 0
      %380 = vmatpush1.bf16.msra.mxu0 0
      %381 = vmatprep.subr.bf16.mxu0 0
      %382 = vmatpush1.bf16.msra.mxu0 0
      %383 = vmatprep.subr.bf16.mxu0 0
      %384 = vmatpush1.bf16.msra.mxu0 0
      %385 = vmatprep.subr.bf16.mxu0 0
      %386 = vmatpush1.bf16.msra.mxu0 0
      %387 = vmatprep.subr.bf16.mxu0 0
      %388 = vmatpush1.bf16.msra.mxu0 %v324
      %389 = vmatprep.subr.bf16.mxu0 0
      %390 = vmatpush1.bf16.msra.mxu0 %v323
      %391 = vmatprep.subr.bf16.mxu0 0
      %392 = vmatpush1.bf16.msra.mxu0 %v322
      %393 = vmatprep.subr.bf16.mxu0 0
      %394 = vmatpush2.bf16.msra.mxu0 0
      %395 = vmatprep.subr.bf16.mxu0 0
      %396 = vmatpush2.bf16.msra.mxu0 0
      %397 = vmatprep.subr.bf16.mxu0 0
      %398 = vmatpush2.bf16.msra.mxu0 0
      %399 = vmatprep.subr.bf16.mxu0 0
      %400 = vmatpush2.bf16.msra.mxu0 0
      %401 = vmatprep.subr.bf16.mxu0 0
      %402 = vmatpush2.bf16.msra.mxu0 0
      %403 = vmatprep.subr.bf16.mxu0 0
      %404 = vmatpush2.bf16.msra.mxu0 0
      %405 = vmatprep.subr.bf16.mxu0 0
      %406 = vmatpush2.bf16.msra.mxu0 0
      %407 = vmatprep.subr.bf16.mxu0 0
      %408 = vmatpush2.bf16.msra.mxu0 0
      %409 = vmatprep.mubr.bf16.mxu0 0
      %410 = vmatmul.mubr.bf16.gmra.mxu0 %v330
      %v411 = vpop.f32.mrf.mxu0
      %v412 = vadd.f32 0.0, %v411
      %v413 = vpop.f32.mrf.mxu0
      %v414 = vpop.f32.mrf.mxu0
      %v415 = vadd.f32 0.0, %v414
      %v416 = vpop.f32.mrf.mxu0
      %417 = vmatprep.mubr.bf16.mxu0 0
      %418 = vmatmul.mubr.bf16.gmra.mxu0 %v333
      %v419 = vpop.f32.mrf.mxu0
      %v420 = vadd.f32 0.0, %v419
      %v421 = vpop.f32.mrf.mxu0
      %v422 = vpop.f32.mrf.mxu0
      %v423 = vadd.f32 0.0, %v422
      %v424 = vpop.f32.mrf.mxu0
      %425 = vmatprep.mubr.bf16.mxu0 0
      %426 = vmatmul.mubr.bf16.gmra.mxu0 %v336
      %v427 = vpop.f32.mrf.mxu0
      %v428 = vadd.f32 0.0, %v427
      %v429 = vpop.f32.mrf.mxu0
      %v430 = vpop.f32.mrf.mxu0
      %v431 = vadd.f32 0.0, %v430
      %v432 = vpop.f32.mrf.mxu0
      %433 = vmatprep.mubr.bf16.mxu0 0
      %434 = vmatmul.mubr.bf16.gmra.mxu0 %v339
      %v435 = vpop.f32.mrf.mxu0
      %v436 = vadd.f32 0.0, %v435
      %v437 = vpop.f32.mrf.mxu0
      %v438 = vpop.f32.mrf.mxu0
      %v439 = vadd.f32 0.0, %v438
      %v440 = vpop.f32.mrf.mxu0
      %441 = vmatprep.mubr.bf16.mxu0 0
      %442 = vmatmul.mubr.bf16.gmra.mxu0 %v342
      %v443 = vpop.f32.mrf.mxu0
      %v444 = vadd.f32 0.0, %v443
      %v445 = vpop.f32.mrf.mxu0
      %v446 = vpop.f32.mrf.mxu0
      %v447 = vadd.f32 0.0, %v446
      %v448 = vpop.f32.mrf.mxu0
      %449 = vmatprep.mubr.bf16.mxu0 0
      %450 = vmatmul.mubr.bf16.gmra.mxu0 %v345
      %v451 = vpop.f32.mrf.mxu0
      %v452 = vadd.f32 0.0, %v451
      %v453 = vpop.f32.mrf.mxu0
      %v454 = vpop.f32.mrf.mxu0
      %v455 = vadd.f32 0.0, %v454
      %v456 = vpop.f32.mrf.mxu0
      %457 = vmatprep.mubr.bf16.mxu0 0
      %458 = vmatmul.mubr.bf16.gmra.mxu0 %v348
      %v459 = vpop.f32.mrf.mxu0
      %v460 = vadd.f32 0.0, %v459
      %v461 = vpop.f32.mrf.mxu0
      %v462 = vpop.f32.mrf.mxu0
      %v463 = vadd.f32 0.0, %v462
      %v464 = vpop.f32.mrf.mxu0
      %465 = vmatprep.mubr.bf16.mxu0 0
      %466 = vmatmul.mubr.bf16.gmra.mxu0 %v351
      %v467 = vpop.f32.mrf.mxu0
      %v468 = vadd.f32 0.0, %v467
      %v469 = vpop.f32.mrf.mxu0
      %v470 = vpop.f32.mrf.mxu0
      %v471 = vadd.f32 0.0, %v470
      %v472 = vpop.f32.mrf.mxu0
      %473 = vmatprep.mubr.bf16.mxu0 0
      %474 = vmatmul.mubr.bf16.gmra.mxu0 %v354
      %v475 = vpop.f32.mrf.mxu0
      %v476 = vadd.f32 0.0, %v475
      %v477 = vpop.f32.mrf.mxu0
      %v478 = vpop.f32.mrf.mxu0
      %v479 = vadd.f32 0.0, %v478
      %v480 = vpop.f32.mrf.mxu0
      %481 = vmatprep.mubr.bf16.mxu0 0
      %482 = vmatmul.mubr.bf16.gmra.mxu0 %v357
      %v483 = vpop.f32.mrf.mxu0
      %v484 = vadd.f32 0.0, %v483
      %v485 = vpop.f32.mrf.mxu0
      %v486 = vpop.f32.mrf.mxu0
      %v487 = vadd.f32 0.0, %v486
      %v488 = vpop.f32.mrf.mxu0
      %489 = vmatprep.mubr.bf16.mxu0 0
      %490 = vmatmul.mubr.bf16.gmra.mxu0 %v360
      %v491 = vpop.f32.mrf.mxu0
      %v492 = vadd.f32 0.0, %v491
      %v493 = vpop.f32.mrf.mxu0
      %v494 = vpop.f32.mrf.mxu0
      %v495 = vadd.f32 0.0, %v494
      %v496 = vpop.f32.mrf.mxu0
      %497 = vmatprep.mubr.bf16.mxu0 0
      %498 = vmatmul.mubr.bf16.gmra.mxu0 %v363
      %v499 = vpop.f32.mrf.mxu0
      %v500 = vadd.f32 0.0, %v499
      %v501 = vpop.f32.mrf.mxu0
      %v502 = vpop.f32.mrf.mxu0
      %v503 = vadd.f32 0.0, %v502
      %v504 = vpop.f32.mrf.mxu0
      %505 = vmatprep.mubr.bf16.mxu0 0
      %506 = vmatmul.mubr.bf16.gmra.mxu0 %v366
      %v507 = vpop.f32.mrf.mxu0
      %v508 = vadd.f32 0.0, %v507
      %v509 = vpop.f32.mrf.mxu0
      %v510 = vpop.f32.mrf.mxu0
      %v511 = vadd.f32 0.0, %v510
      %v512 = vpop.f32.mrf.mxu0
      %513 = vmatprep.mubr.bf16.mxu0 0
      %514 = vmatmul.mubr.bf16.gmra.mxu0 %v369
      %v515 = vpop.f32.mrf.mxu0
      %v516 = vadd.f32 0.0, %v515
      %v517 = vpop.f32.mrf.mxu0
      %v518 = vpop.f32.mrf.mxu0
      %v519 = vadd.f32 0.0, %v518
      %v520 = vpop.f32.mrf.mxu0
      %521 = vmatprep.mubr.bf16.mxu0 0
      %522 = vmatmul.mubr.bf16.gmra.mxu0 %v372
      %v523 = vpop.f32.mrf.mxu0
      %v524 = vadd.f32 0.0, %v523
      %v525 = vpop.f32.mrf.mxu0
      %v526 = vpop.f32.mrf.mxu0
      %v527 = vadd.f32 0.0, %v526
      %v528 = vpop.f32.mrf.mxu0
      %529 = vmatprep.mubr.bf16.mxu0 0
      %530 = vmatmul.mubr.bf16.gmra.mxu0 %v375
      %v531 = vpop.f32.mrf.mxu0
      %v532 = vadd.f32 0.0, %v531
      %v533 = vpop.f32.mrf.mxu0
      %v534 = vpop.f32.mrf.mxu0
      %v535 = vadd.f32 0.0, %v534
      %v536 = vpop.f32.mrf.mxu0
      %537 = vdwg.mxu0
      %v540 = vunpack.c.l.b16 %v183
      %v541 = vunpack.c.l.b16 %v184
      %v542 = vpack.c.b16 %v541, %v540
      %v549 = vunpack.c.l.b16 %v215
      %v550 = vunpack.c.l.b16 %v216
      %v551 = vunpack.c.l.b16 %v217
      %v552 = vunpack.c.l.b16 %v218
      %v553 = vunpack.c.l.b16 %v219
      %v554 = vunpack.c.l.b16 %v220
      %v555 = vpack.c.b16 %v550, %v549
      %v556 = vpack.c.b16 %v552, %v551
      %v557 = vpack.c.b16 %v554, %v553
      %v562 = vsel %vm328, %v542, 0
      %564 = vmatprep.subr.bf16.mxu0 0
      %565 = vmatpush1.bf16.msra.mxu0 0
      %566 = vmatprep.subr.bf16.mxu0 0
      %567 = vmatpush1.bf16.msra.mxu0 0
      %568 = vmatprep.subr.bf16.mxu0 0
      %569 = vmatpush1.bf16.msra.mxu0 0
      %570 = vmatprep.subr.bf16.mxu0 0
      %571 = vmatpush1.bf16.msra.mxu0 0
      %572 = vmatprep.subr.bf16.mxu0 0
      %573 = vmatpush1.bf16.msra.mxu0 0
      %574 = vmatprep.subr.bf16.mxu0 0
      %575 = vmatpush1.bf16.msra.mxu0 %v557
      %576 = vmatprep.subr.bf16.mxu0 0
      %577 = vmatpush1.bf16.msra.mxu0 %v556
      %578 = vmatprep.subr.bf16.mxu0 0
      %579 = vmatpush1.bf16.msra.mxu0 %v555
      %580 = vmatprep.subr.bf16.mxu0 0
      %581 = vmatpush2.bf16.msra.mxu0 0
      %582 = vmatprep.subr.bf16.mxu0 0
      %583 = vmatpush2.bf16.msra.mxu0 0
      %584 = vmatprep.subr.bf16.mxu0 0
      %585 = vmatpush2.bf16.msra.mxu0 0
      %586 = vmatprep.subr.bf16.mxu0 0
      %587 = vmatpush2.bf16.msra.mxu0 0
      %588 = vmatprep.subr.bf16.mxu0 0
      %589 = vmatpush2.bf16.msra.mxu0 0
      %590 = vmatprep.subr.bf16.mxu0 0
      %591 = vmatpush2.bf16.msra.mxu0 0
      %592 = vmatprep.subr.bf16.mxu0 0
      %593 = vmatpush2.bf16.msra.mxu0 0
      %594 = vmatprep.subr.bf16.mxu0 0
      %595 = vmatpush2.bf16.msra.mxu0 0
      %596 = vmatprep.mubr.bf16.mxu0 0
      %597 = vmatmul.mubr.bf16.gmra.mxu0 %v562
      %v598 = vpop.f32.mrf.mxu0
      %v599 = vadd.f32 %v412, %v598
      %v600 = vpop.f32.mrf.mxu0
      %v601 = vpop.f32.mrf.mxu0
      %v602 = vadd.f32 %v415, %v601
      %v603 = vpop.f32.mrf.mxu0
      %604 = vmatprep.mubr.bf16.mxu0 0
      %605 = vmatmul.mubr.bf16.gmra.mxu0 %v330
      %v606 = vpop.f32.mrf.mxu0
      %v607 = vadd.f32 %v420, %v606
      %v608 = vpop.f32.mrf.mxu0
      %v609 = vpop.f32.mrf.mxu0
      %v610 = vadd.f32 %v423, %v609
      %v611 = vpop.f32.mrf.mxu0
      %612 = vmatprep.mubr.bf16.mxu0 0
      %613 = vmatmul.mubr.bf16.gmra.mxu0 %v333
      %v614 = vpop.f32.mrf.mxu0
      %v615 = vadd.f32 %v428, %v614
      %v616 = vpop.f32.mrf.mxu0
      %v617 = vpop.f32.mrf.mxu0
      %v618 = vadd.f32 %v431, %v617
      %v619 = vpop.f32.mrf.mxu0
      %620 = vmatprep.mubr.bf16.mxu0 0
      %621 = vmatmul.mubr.bf16.gmra.mxu0 %v336
      %v622 = vpop.f32.mrf.mxu0
      %v623 = vadd.f32 %v436, %v622
      %v624 = vpop.f32.mrf.mxu0
      %v625 = vpop.f32.mrf.mxu0
      %v626 = vadd.f32 %v439, %v625
      %v627 = vpop.f32.mrf.mxu0
      %628 = vmatprep.mubr.bf16.mxu0 0
      %629 = vmatmul.mubr.bf16.gmra.mxu0 %v339
      %v630 = vpop.f32.mrf.mxu0
      %v631 = vadd.f32 %v444, %v630
      %v632 = vpop.f32.mrf.mxu0
      %v633 = vpop.f32.mrf.mxu0
      %v634 = vadd.f32 %v447, %v633
      %v635 = vpop.f32.mrf.mxu0
      %636 = vmatprep.mubr.bf16.mxu0 0
      %637 = vmatmul.mubr.bf16.gmra.mxu0 %v342
      %v638 = vpop.f32.mrf.mxu0
      %v639 = vadd.f32 %v452, %v638
      %v640 = vpop.f32.mrf.mxu0
      %v641 = vpop.f32.mrf.mxu0
      %v642 = vadd.f32 %v455, %v641
      %v643 = vpop.f32.mrf.mxu0
      %644 = vmatprep.mubr.bf16.mxu0 0
      %645 = vmatmul.mubr.bf16.gmra.mxu0 %v345
      %v646 = vpop.f32.mrf.mxu0
      %v647 = vadd.f32 %v460, %v646
      %v648 = vpop.f32.mrf.mxu0
      %v649 = vpop.f32.mrf.mxu0
      %v650 = vadd.f32 %v463, %v649
      %v651 = vpop.f32.mrf.mxu0
      %652 = vmatprep.mubr.bf16.mxu0 0
      %653 = vmatmul.mubr.bf16.gmra.mxu0 %v348
      %v654 = vpop.f32.mrf.mxu0
      %v655 = vadd.f32 %v468, %v654
      %v656 = vpop.f32.mrf.mxu0
      %v657 = vpop.f32.mrf.mxu0
      %v658 = vadd.f32 %v471, %v657
      %v659 = vpop.f32.mrf.mxu0
      %660 = vmatprep.mubr.bf16.mxu0 0
      %661 = vmatmul.mubr.bf16.gmra.mxu0 %v351
      %v662 = vpop.f32.mrf.mxu0
      %v663 = vadd.f32 %v476, %v662
      %v664 = vpop.f32.mrf.mxu0
      %v665 = vpop.f32.mrf.mxu0
      %v666 = vadd.f32 %v479, %v665
      %v667 = vpop.f32.mrf.mxu0
      %668 = vmatprep.mubr.bf16.mxu0 0
      %669 = vmatmul.mubr.bf16.gmra.mxu0 %v354
      %v670 = vpop.f32.mrf.mxu0
      %v671 = vadd.f32 %v484, %v670
      %v672 = vpop.f32.mrf.mxu0
      %v673 = vpop.f32.mrf.mxu0
      %v674 = vadd.f32 %v487, %v673
      %v675 = vpop.f32.mrf.mxu0
      %676 = vmatprep.mubr.bf16.mxu0 0
      %677 = vmatmul.mubr.bf16.gmra.mxu0 %v357
      %v678 = vpop.f32.mrf.mxu0
      %v679 = vadd.f32 %v492, %v678
      %v680 = vpop.f32.mrf.mxu0
      %v681 = vpop.f32.mrf.mxu0
      %v682 = vadd.f32 %v495, %v681
      %v683 = vpop.f32.mrf.mxu0
      %684 = vmatprep.mubr.bf16.mxu0 0
      %685 = vmatmul.mubr.bf16.gmra.mxu0 %v360
      %v686 = vpop.f32.mrf.mxu0
      %v687 = vadd.f32 %v500, %v686
      %v688 = vpop.f32.mrf.mxu0
      %v689 = vpop.f32.mrf.mxu0
      %v690 = vadd.f32 %v503, %v689
      %v691 = vpop.f32.mrf.mxu0
      %692 = vmatprep.mubr.bf16.mxu0 0
      %693 = vmatmul.mubr.bf16.gmra.mxu0 %v363
      %v694 = vpop.f32.mrf.mxu0
      %v695 = vadd.f32 %v508, %v694
      %v696 = vpop.f32.mrf.mxu0
      %v697 = vpop.f32.mrf.mxu0
      %v698 = vadd.f32 %v511, %v697
      %v699 = vpop.f32.mrf.mxu0
      %700 = vmatprep.mubr.bf16.mxu0 0
      %701 = vmatmul.mubr.bf16.gmra.mxu0 %v366
      %v702 = vpop.f32.mrf.mxu0
      %v703 = vadd.f32 %v516, %v702
      %v704 = vpop.f32.mrf.mxu0
      %v705 = vpop.f32.mrf.mxu0
      %v706 = vadd.f32 %v519, %v705
      %v707 = vpop.f32.mrf.mxu0
      %708 = vmatprep.mubr.bf16.mxu0 0
      %709 = vmatmul.mubr.bf16.gmra.mxu0 %v369
      %v710 = vpop.f32.mrf.mxu0
      %v711 = vadd.f32 %v524, %v710
      %v712 = vpop.f32.mrf.mxu0
      %v713 = vpop.f32.mrf.mxu0
      %v714 = vadd.f32 %v527, %v713
      %v715 = vpop.f32.mrf.mxu0
      %716 = vmatprep.mubr.bf16.mxu0 0
      %717 = vmatmul.mubr.bf16.gmra.mxu0 %v372
      %v718 = vpop.f32.mrf.mxu0
      %v719 = vadd.f32 %v532, %v718
      %v720 = vpop.f32.mrf.mxu0
      %v721 = vpop.f32.mrf.mxu0
      %v722 = vadd.f32 %v535, %v721
      %v723 = vpop.f32.mrf.mxu0
      %724 = vdwg.mxu0
      %v725 = vld [vmem:[%s172 + $0x10] sm:$0xf]
      %v726 = vld [vmem:[%s172 + $0x14] sm:$0xf]
      %v727 = vld [vmem:[%s172 + $0x18] sm:$0xf]
      %v728 = vld [vmem:[%s172 + $0x1c] sm:$0xf]
      %v729 = vld [vmem:[%s172 + $0x20] sm:$0xf]
      %v730 = vld [vmem:[%s172 + $0x24] sm:$0xf]
      %v731 = vld [vmem:[%s172 + $0x28] sm:$0xf]
      %v732 = vld [vmem:[%s172 + $0x2c] sm:$0xf]
      %v733 = vld [vmem:[%s172 + $0x30] sm:$0xf]
      %v734 = vld [vmem:[%s172 + $0x34] sm:$0xf]
      %v735 = vld [vmem:[%s172 + $0x38] sm:$0xf]
      %v736 = vld [vmem:[%s172 + $0x3c] sm:$0xf]
      %v737 = vld [vmem:[%s172 + $0x40] sm:$0xf]
      %v738 = vld [vmem:[%s172 + $0x44] sm:$0xf]
      %v739 = vld [vmem:[%s172 + $0x48] sm:$0xf]
      %v740 = vld [vmem:[%s172 + $0x4c] sm:$0xf]
      %v741 = vld [vmem:[%s172 + $0x50] sm:$0xf]
      %v742 = vld [vmem:[%s172 + $0x54] sm:$0xf]
      %v743 = vld [vmem:[%s172 + $0x58] sm:$0xf]
      %v744 = vld [vmem:[%s172 + $0x5c] sm:$0xf]
      %v745 = vld [vmem:[%s172 + $0x60] sm:$0xf]
      %v746 = vld [vmem:[%s172 + $0x64] sm:$0xf]
      %v747 = vld [vmem:[%s172 + $0x68] sm:$0xf]
      %v748 = vld [vmem:[%s172 + $0x6c] sm:$0xf]
      %v749 = vld [vmem:[%s172 + $0x70] sm:$0xf]
      %v750 = vld [vmem:[%s172 + $0x74] sm:$0xf]
      %v751 = vld [vmem:[%s172 + $0x78] sm:$0xf]
      %v752 = vld [vmem:[%s172 + $0x7c] sm:$0xf]
      %v753 = vld [vmem:[%s172 + $0x80] sm:$0xf]
      %v754 = vld [vmem:[%s172 + $0x84] sm:$0xf]
      %v755 = vld [vmem:[%s172 + $0x88] sm:$0xf]
      %v756 = vld [vmem:[%s172 + $0x8c] sm:$0xf]
      %s757 = scalar_lea.vmem %s1, 48
      %v758 = vld [vmem:[%s757] sm:$0xf]
      %v759 = vld [vmem:[%s757 + $0x4] sm:$0xf]
      %v760 = vld [vmem:[%s757 + $0x8] sm:$0xf]
      %v761 = vld [vmem:[%s757 + $0xc] sm:$0xf]
      %v762 = vld [vmem:[%s757 + $0x10] sm:$0xf]
      %v763 = vld [vmem:[%s757 + $0x14] sm:$0xf]
      %v796 = vunpack.c.l.b16 %v725
      %v797 = vunpack.c.l.b16 %v726
      %v798 = vunpack.c.l.b16 %v727
      %v799 = vunpack.c.l.b16 %v728
      %v800 = vunpack.c.l.b16 %v729
      %v801 = vunpack.c.l.b16 %v730
      %v802 = vunpack.c.l.b16 %v731
      %v803 = vunpack.c.l.b16 %v732
      %v804 = vunpack.c.l.b16 %v733
      %v805 = vunpack.c.l.b16 %v734
      %v806 = vunpack.c.l.b16 %v735
      %v807 = vunpack.c.l.b16 %v736
      %v808 = vunpack.c.l.b16 %v737
      %v809 = vunpack.c.l.b16 %v738
      %v810 = vunpack.c.l.b16 %v739
      %v811 = vunpack.c.l.b16 %v740
      %v812 = vunpack.c.l.b16 %v741
      %v813 = vunpack.c.l.b16 %v742
      %v814 = vunpack.c.l.b16 %v743
      %v815 = vunpack.c.l.b16 %v744
      %v816 = vunpack.c.l.b16 %v745
      %v817 = vunpack.c.l.b16 %v746
      %v818 = vunpack.c.l.b16 %v747
      %v819 = vunpack.c.l.b16 %v748
      %v820 = vunpack.c.l.b16 %v749
      %v821 = vunpack.c.l.b16 %v750
      %v822 = vunpack.c.l.b16 %v751
      %v823 = vunpack.c.l.b16 %v752
      %v824 = vunpack.c.l.b16 %v753
      %v825 = vunpack.c.l.b16 %v754
      %v826 = vunpack.c.l.b16 %v755
      %v827 = vunpack.c.l.b16 %v756
      %v828 = vpack.c.b16 %v797, %v796
      %v829 = vpack.c.b16 %v799, %v798
      %v830 = vpack.c.b16 %v801, %v800
      %v831 = vpack.c.b16 %v803, %v802
      %v832 = vpack.c.b16 %v805, %v804
      %v833 = vpack.c.b16 %v807, %v806
      %v834 = vpack.c.b16 %v809, %v808
      %v835 = vpack.c.b16 %v811, %v810
      %v836 = vpack.c.b16 %v813, %v812
      %v837 = vpack.c.b16 %v815, %v814
      %v838 = vpack.c.b16 %v817, %v816
      %v839 = vpack.c.b16 %v819, %v818
      %v840 = vpack.c.b16 %v821, %v820
      %v841 = vpack.c.b16 %v823, %v822
      %v842 = vpack.c.b16 %v825, %v824
      %v843 = vpack.c.b16 %v827, %v826
      %v850 = vunpack.c.l.b16 %v758
      %v851 = vunpack.c.l.b16 %v759
      %v852 = vunpack.c.l.b16 %v760
      %v853 = vunpack.c.l.b16 %v761
      %v854 = vunpack.c.l.b16 %v762
      %v855 = vunpack.c.l.b16 %v763
      %v856 = vpack.c.b16 %v851, %v850
      %v857 = vpack.c.b16 %v853, %v852
      %v858 = vpack.c.b16 %v855, %v854
      %v863 = vsel %vm328, %v828, 0
      %v866 = vsel %vm328, %v829, 0
      %v869 = vsel %vm328, %v830, 0
      %v872 = vsel %vm328, %v831, 0
      %v875 = vsel %vm328, %v832, 0
      %v878 = vsel %vm328, %v833, 0
      %v881 = vsel %vm328, %v834, 0
      %v884 = vsel %vm328, %v835, 0
      %v887 = vsel %vm328, %v836, 0
      %v890 = vsel %vm328, %v837, 0
      %v893 = vsel %vm328, %v838, 0
      %v896 = vsel %vm328, %v839, 0
      %v899 = vsel %vm328, %v840, 0
      %v902 = vsel %vm328, %v841, 0
      %v905 = vsel %vm328, %v842, 0
      %v908 = vsel %vm328, %v843, 0
      %910 = vmatprep.subr.bf16.mxu0 0
      %911 = vmatpush1.bf16.msra.mxu0 0
      %912 = vmatprep.subr.bf16.mxu0 0
      %913 = vmatpush1.bf16.msra.mxu0 0
      %914 = vmatprep.subr.bf16.mxu0 0
      %915 = vmatpush1.bf16.msra.mxu0 0
      %916 = vmatprep.subr.bf16.mxu0 0
      %917 = vmatpush1.bf16.msra.mxu0 0
      %918 = vmatprep.subr.bf16.mxu0 0
      %919 = vmatpush1.bf16.msra.mxu0 0
      %920 = vmatprep.subr.bf16.mxu0 0
      %921 = vmatpush1.bf16.msra.mxu0 %v858
      %922 = vmatprep.subr.bf16.mxu0 0
      %923 = vmatpush1.bf16.msra.mxu0 %v857
      %924 = vmatprep.subr.bf16.mxu0 0
      %925 = vmatpush1.bf16.msra.mxu0 %v856
      %926 = vmatprep.subr.bf16.mxu0 0
      %927 = vmatpush2.bf16.msra.mxu0 0
      %928 = vmatprep.subr.bf16.mxu0 0
      %929 = vmatpush2.bf16.msra.mxu0 0
      %930 = vmatprep.subr.bf16.mxu0 0
      %931 = vmatpush2.bf16.msra.mxu0 0
      %932 = vmatprep.subr.bf16.mxu0 0
      %933 = vmatpush2.bf16.msra.mxu0 0
      %934 = vmatprep.subr.bf16.mxu0 0
      %935 = vmatpush2.bf16.msra.mxu0 0
      %936 = vmatprep.subr.bf16.mxu0 0
      %937 = vmatpush2.bf16.msra.mxu0 0
      %938 = vmatprep.subr.bf16.mxu0 0
      %939 = vmatpush2.bf16.msra.mxu0 0
      %940 = vmatprep.subr.bf16.mxu0 0
      %941 = vmatpush2.bf16.msra.mxu0 0
      %942 = vmatprep.mubr.bf16.mxu0 0
      %943 = vmatmul.mubr.bf16.gmra.mxu0 %v863
      %v944 = vpop.f32.mrf.mxu0
      %v945 = vadd.f32 0.0, %v944
      %v946 = vpop.f32.mrf.mxu0
      %v947 = vpop.f32.mrf.mxu0
      %v948 = vadd.f32 0.0, %v947
      %v949 = vpop.f32.mrf.mxu0
      %950 = vmatprep.mubr.bf16.mxu0 0
      %951 = vmatmul.mubr.bf16.gmra.mxu0 %v866
      %v952 = vpop.f32.mrf.mxu0
      %v953 = vadd.f32 0.0, %v952
      %v954 = vpop.f32.mrf.mxu0
      %v955 = vpop.f32.mrf.mxu0
      %v956 = vadd.f32 0.0, %v955
      %v957 = vpop.f32.mrf.mxu0
      %958 = vmatprep.mubr.bf16.mxu0 0
      %959 = vmatmul.mubr.bf16.gmra.mxu0 %v869
      %v960 = vpop.f32.mrf.mxu0
      %v961 = vadd.f32 0.0, %v960
      %v962 = vpop.f32.mrf.mxu0
      %v963 = vpop.f32.mrf.mxu0
      %v964 = vadd.f32 0.0, %v963
      %v965 = vpop.f32.mrf.mxu0
      %966 = vmatprep.mubr.bf16.mxu0 0
      %967 = vmatmul.mubr.bf16.gmra.mxu0 %v872
      %v968 = vpop.f32.mrf.mxu0
      %v969 = vadd.f32 0.0, %v968
      %v970 = vpop.f32.mrf.mxu0
      %v971 = vpop.f32.mrf.mxu0
      %v972 = vadd.f32 0.0, %v971
      %v973 = vpop.f32.mrf.mxu0
      %974 = vmatprep.mubr.bf16.mxu0 0
      %975 = vmatmul.mubr.bf16.gmra.mxu0 %v875
      %v976 = vpop.f32.mrf.mxu0
      %v977 = vadd.f32 0.0, %v976
      %v978 = vpop.f32.mrf.mxu0
      %v979 = vpop.f32.mrf.mxu0
      %v980 = vadd.f32 0.0, %v979
      %v981 = vpop.f32.mrf.mxu0
      %982 = vmatprep.mubr.bf16.mxu0 0
      %983 = vmatmul.mubr.bf16.gmra.mxu0 %v878
      %v984 = vpop.f32.mrf.mxu0
      %v985 = vadd.f32 0.0, %v984
      %v986 = vpop.f32.mrf.mxu0
      %v987 = vpop.f32.mrf.mxu0
      %v988 = vadd.f32 0.0, %v987
      %v989 = vpop.f32.mrf.mxu0
      %990 = vmatprep.mubr.bf16.mxu0 0
      %991 = vmatmul.mubr.bf16.gmra.mxu0 %v881
      %v992 = vpop.f32.mrf.mxu0
      %v993 = vadd.f32 0.0, %v992
      %v994 = vpop.f32.mrf.mxu0
      %v995 = vpop.f32.mrf.mxu0
      %v996 = vadd.f32 0.0, %v995
      %v997 = vpop.f32.mrf.mxu0
      %998 = vmatprep.mubr.bf16.mxu0 0
      %999 = vmatmul.mubr.bf16.gmra.mxu0 %v884
      %v1000 = vpop.f32.mrf.mxu0
      %v1001 = vadd.f32 0.0, %v1000
      %v1002 = vpop.f32.mrf.mxu0
      %v1003 = vpop.f32.mrf.mxu0
      %v1004 = vadd.f32 0.0, %v1003
      %v1005 = vpop.f32.mrf.mxu0
      %1006 = vmatprep.mubr.bf16.mxu0 0
      %1007 = vmatmul.mubr.bf16.gmra.mxu0 %v887
      %v1008 = vpop.f32.mrf.mxu0
      %v1009 = vadd.f32 0.0, %v1008
      %v1010 = vpop.f32.mrf.mxu0
      %v1011 = vpop.f32.mrf.mxu0
      %v1012 = vadd.f32 0.0, %v1011
      %v1013 = vpop.f32.mrf.mxu0
      %1014 = vmatprep.mubr.bf16.mxu0 0
      %1015 = vmatmul.mubr.bf16.gmra.mxu0 %v890
      %v1016 = vpop.f32.mrf.mxu0
      %v1017 = vadd.f32 0.0, %v1016
      %v1018 = vpop.f32.mrf.mxu0
      %v1019 = vpop.f32.mrf.mxu0
      %v1020 = vadd.f32 0.0, %v1019
      %v1021 = vpop.f32.mrf.mxu0
      %1022 = vmatprep.mubr.bf16.mxu0 0
      %1023 = vmatmul.mubr.bf16.gmra.mxu0 %v893
      %v1024 = vpop.f32.mrf.mxu0
      %v1025 = vadd.f32 0.0, %v1024
      %v1026 = vpop.f32.mrf.mxu0
      %v1027 = vpop.f32.mrf.mxu0
      %v1028 = vadd.f32 0.0, %v1027
      %v1029 = vpop.f32.mrf.mxu0
      %1030 = vmatprep.mubr.bf16.mxu0 0
      %1031 = vmatmul.mubr.bf16.gmra.mxu0 %v896
      %v1032 = vpop.f32.mrf.mxu0
      %v1033 = vadd.f32 0.0, %v1032
      %v1034 = vpop.f32.mrf.mxu0
      %v1035 = vpop.f32.mrf.mxu0
      %v1036 = vadd.f32 0.0, %v1035
      %v1037 = vpop.f32.mrf.mxu0
      %1038 = vmatprep.mubr.bf16.mxu0 0
      %1039 = vmatmul.mubr.bf16.gmra.mxu0 %v899
      %v1040 = vpop.f32.mrf.mxu0
      %v1041 = vadd.f32 0.0, %v1040
      %v1042 = vpop.f32.mrf.mxu0
      %v1043 = vpop.f32.mrf.mxu0
      %v1044 = vadd.f32 0.0, %v1043
      %v1045 = vpop.f32.mrf.mxu0
      %1046 = vmatprep.mubr.bf16.mxu0 0
      %1047 = vmatmul.mubr.bf16.gmra.mxu0 %v902
      %v1048 = vpop.f32.mrf.mxu0
      %v1049 = vadd.f32 0.0, %v1048
      %v1050 = vpop.f32.mrf.mxu0
      %v1051 = vpop.f32.mrf.mxu0
      %v1052 = vadd.f32 0.0, %v1051
      %v1053 = vpop.f32.mrf.mxu0
      %1054 = vmatprep.mubr.bf16.mxu0 0
      %1055 = vmatmul.mubr.bf16.gmra.mxu0 %v905
      %v1056 = vpop.f32.mrf.mxu0
      %v1057 = vadd.f32 0.0, %v1056
      %v1058 = vpop.f32.mrf.mxu0
      %v1059 = vpop.f32.mrf.mxu0
      %v1060 = vadd.f32 0.0, %v1059
      %v1061 = vpop.f32.mrf.mxu0
      %1062 = vmatprep.mubr.bf16.mxu0 0
      %1063 = vmatmul.mubr.bf16.gmra.mxu0 %v908
      %v1064 = vpop.f32.mrf.mxu0
      %v1065 = vadd.f32 0.0, %v1064
      %v1066 = vpop.f32.mrf.mxu0
      %v1067 = vpop.f32.mrf.mxu0
      %v1068 = vadd.f32 0.0, %v1067
      %v1069 = vpop.f32.mrf.mxu0
      %1070 = vdwg.mxu0
      %v1071 = vadd.f32 %v599, %v945
      %v1072 = vadd.f32 %v602, %v948
      %v1073 = vadd.f32 %v607, %v953
      %v1074 = vadd.f32 %v610, %v956
      %v1075 = vadd.f32 %v615, %v961
      %v1076 = vadd.f32 %v618, %v964
      %v1077 = vadd.f32 %v623, %v969
      %v1078 = vadd.f32 %v626, %v972
      %v1079 = vadd.f32 %v631, %v977
      %v1080 = vadd.f32 %v634, %v980
      %v1081 = vadd.f32 %v639, %v985
      %v1082 = vadd.f32 %v642, %v988
      %v1083 = vadd.f32 %v647, %v993
      %v1084 = vadd.f32 %v650, %v996
      %v1085 = vadd.f32 %v655, %v1001
      %v1086 = vadd.f32 %v658, %v1004
      %v1087 = vadd.f32 %v663, %v1009
      %v1088 = vadd.f32 %v666, %v1012
      %v1089 = vadd.f32 %v671, %v1017
      %v1090 = vadd.f32 %v674, %v1020
      %v1091 = vadd.f32 %v679, %v1025
      %v1092 = vadd.f32 %v682, %v1028
      %v1093 = vadd.f32 %v687, %v1033
      %v1094 = vadd.f32 %v690, %v1036
      %v1095 = vadd.f32 %v695, %v1041
      %v1096 = vadd.f32 %v698, %v1044
      %v1097 = vadd.f32 %v703, %v1049
      %v1098 = vadd.f32 %v706, %v1052
      %v1099 = vadd.f32 %v711, %v1057
      %v1100 = vadd.f32 %v714, %v1060
      %v1101 = vadd.f32 %v719, %v1065
      %v1102 = vadd.f32 %v722, %v1068
      %v1103 = vpack.c.bf16 %v1072, %v1071
      %v1104 = vpack.c.bf16 %v1074, %v1073
      %v1105 = vpack.c.bf16 %v1076, %v1075
      %v1106 = vpack.c.bf16 %v1078, %v1077
      %v1107 = vpack.c.bf16 %v1080, %v1079
      %v1108 = vpack.c.bf16 %v1082, %v1081
      %v1109 = vpack.c.bf16 %v1084, %v1083
      %v1110 = vpack.c.bf16 %v1086, %v1085
      %v1111 = vpack.c.bf16 %v1088, %v1087
      %v1112 = vpack.c.bf16 %v1090, %v1089
      %v1113 = vpack.c.bf16 %v1092, %v1091
      %v1114 = vpack.c.bf16 %v1094, %v1093
      %v1115 = vpack.c.bf16 %v1096, %v1095
      %v1116 = vpack.c.bf16 %v1098, %v1097
      %v1117 = vpack.c.bf16 %v1100, %v1099
      %v1118 = vpack.c.bf16 %v1102, %v1101
      %v1135 = vunpack.c.l.b16 %v1103
      %v1136 = vunpack.c.h.b16 %v1103
      %v1137 = vunpack.c.l.b16 %v1104
      %v1138 = vunpack.c.h.b16 %v1104
      %v1139 = vunpack.c.l.b16 %v1105
      %v1140 = vunpack.c.h.b16 %v1105
      %v1141 = vunpack.c.l.b16 %v1106
      %v1142 = vunpack.c.h.b16 %v1106
      %v1143 = vunpack.c.l.b16 %v1107
      %v1144 = vunpack.c.h.b16 %v1107
      %v1145 = vunpack.c.l.b16 %v1108
      %v1146 = vunpack.c.h.b16 %v1108
      %v1147 = vunpack.c.l.b16 %v1109
      %v1148 = vunpack.c.h.b16 %v1109
      %v1149 = vunpack.c.l.b16 %v1110
      %v1150 = vunpack.c.h.b16 %v1110
      %v1151 = vunpack.c.l.b16 %v1111
      %v1152 = vunpack.c.h.b16 %v1111
      %v1153 = vunpack.c.l.b16 %v1112
      %v1154 = vunpack.c.h.b16 %v1112
      %v1155 = vunpack.c.l.b16 %v1113
      %v1156 = vunpack.c.h.b16 %v1113
      %v1157 = vunpack.c.l.b16 %v1114
      %v1158 = vunpack.c.h.b16 %v1114
      %v1159 = vunpack.c.l.b16 %v1115
      %v1160 = vunpack.c.h.b16 %v1115
      %v1161 = vunpack.c.l.b16 %v1116
      %v1162 = vunpack.c.h.b16 %v1116
      %v1163 = vunpack.c.l.b16 %v1117
      %v1164 = vunpack.c.h.b16 %v1117
      %v1165 = vunpack.c.l.b16 %v1118
      %v1166 = vunpack.c.h.b16 %v1118
      %v1167 = vpack.c.b16 %v1135, %v1135
      %v1168 = vpack.c.b16 %v1136, %v1136
      %v1169 = vpack.c.b16 %v1137, %v1137
      %v1170 = vpack.c.b16 %v1138, %v1138
      %v1171 = vpack.c.b16 %v1139, %v1139
      %v1172 = vpack.c.b16 %v1140, %v1140
      %v1173 = vpack.c.b16 %v1141, %v1141
      %v1174 = vpack.c.b16 %v1142, %v1142
      %v1175 = vpack.c.b16 %v1143, %v1143
      %v1176 = vpack.c.b16 %v1144, %v1144
      %v1177 = vpack.c.b16 %v1145, %v1145
      %v1178 = vpack.c.b16 %v1146, %v1146
      %v1179 = vpack.c.b16 %v1147, %v1147
      %v1180 = vpack.c.b16 %v1148, %v1148
      %v1181 = vpack.c.b16 %v1149, %v1149
      %v1182 = vpack.c.b16 %v1150, %v1150
      %v1183 = vpack.c.b16 %v1151, %v1151
      %v1184 = vpack.c.b16 %v1152, %v1152
      %v1185 = vpack.c.b16 %v1153, %v1153
      %v1186 = vpack.c.b16 %v1154, %v1154
      %v1187 = vpack.c.b16 %v1155, %v1155
      %v1188 = vpack.c.b16 %v1156, %v1156
      %v1189 = vpack.c.b16 %v1157, %v1157
      %v1190 = vpack.c.b16 %v1158, %v1158
      %v1191 = vpack.c.b16 %v1159, %v1159
      %v1192 = vpack.c.b16 %v1160, %v1160
      %v1193 = vpack.c.b16 %v1161, %v1161
      %v1194 = vpack.c.b16 %v1162, %v1162
      %v1195 = vpack.c.b16 %v1163, %v1163
      %v1196 = vpack.c.b16 %v1164, %v1164
      %v1197 = vpack.c.b16 %v1165, %v1165
      %v1198 = vpack.c.b16 %v1166, %v1166
      %vm1231 = vcmask 125952
      %1232 = vst.msk [vmem:[%s177] sm:$0xf] %vm1231, %v1167
      %1233 = vst.msk [vmem:[%s177 + $0x4] sm:$0xf] %vm1231, %v1168
      %1234 = vst.msk [vmem:[%s177 + $0x8] sm:$0xf] %vm1231, %v1169
      %1235 = vst.msk [vmem:[%s177 + $0xc] sm:$0xf] %vm1231, %v1170
      %1236 = vst.msk [vmem:[%s177 + $0x10] sm:$0xf] %vm1231, %v1171
      %1237 = vst.msk [vmem:[%s177 + $0x14] sm:$0xf] %vm1231, %v1172
      %1238 = vst.msk [vmem:[%s177 + $0x18] sm:$0xf] %vm1231, %v1173
      %1239 = vst.msk [vmem:[%s177 + $0x1c] sm:$0xf] %vm1231, %v1174
      %1240 = vst.msk [vmem:[%s177 + $0x20] sm:$0xf] %vm1231, %v1175
      %1241 = vst.msk [vmem:[%s177 + $0x24] sm:$0xf] %vm1231, %v1176
      %1242 = vst.msk [vmem:[%s177 + $0x28] sm:$0xf] %vm1231, %v1177
      %1243 = vst.msk [vmem:[%s177 + $0x2c] sm:$0xf] %vm1231, %v1178
      %1244 = vst.msk [vmem:[%s177 + $0x30] sm:$0xf] %vm1231, %v1179
      %1245 = vst.msk [vmem:[%s177 + $0x34] sm:$0xf] %vm1231, %v1180
      %1246 = vst.msk [vmem:[%s177 + $0x38] sm:$0xf] %vm1231, %v1181
      %1247 = vst.msk [vmem:[%s177 + $0x3c] sm:$0xf] %vm1231, %v1182
      %1248 = vst.msk [vmem:[%s177 + $0x40] sm:$0xf] %vm1231, %v1183
      %1249 = vst.msk [vmem:[%s177 + $0x44] sm:$0xf] %vm1231, %v1184
      %1250 = vst.msk [vmem:[%s177 + $0x48] sm:$0xf] %vm1231, %v1185
      %1251 = vst.msk [vmem:[%s177 + $0x4c] sm:$0xf] %vm1231, %v1186
      %1252 = vst.msk [vmem:[%s177 + $0x50] sm:$0xf] %vm1231, %v1187
      %1253 = vst.msk [vmem:[%s177 + $0x54] sm:$0xf] %vm1231, %v1188
      %1254 = vst.msk [vmem:[%s177 + $0x58] sm:$0xf] %vm1231, %v1189
      %1255 = vst.msk [vmem:[%s177 + $0x5c] sm:$0xf] %vm1231, %v1190
      %1256 = vst.msk [vmem:[%s177 + $0x60] sm:$0xf] %vm1231, %v1191
      %1257 = vst.msk [vmem:[%s177 + $0x64] sm:$0xf] %vm1231, %v1192
      %1258 = vst.msk [vmem:[%s177 + $0x68] sm:$0xf] %vm1231, %v1193
      %1259 = vst.msk [vmem:[%s177 + $0x6c] sm:$0xf] %vm1231, %v1194
      %1260 = vst.msk [vmem:[%s177 + $0x70] sm:$0xf] %vm1231, %v1195
      %1261 = vst.msk [vmem:[%s177 + $0x74] sm:$0xf] %vm1231, %v1196
      %1262 = vst.msk [vmem:[%s177 + $0x78] sm:$0xf] %vm1231, %v1197
      %1263 = vst.msk [vmem:[%s177 + $0x7c] sm:$0xf] %vm1231, %v1198
      %vm1264 = vcmask 130048
      %v1265 = vsel %vm1264, %v1071, 0.0
      %v1266 = vsel %vm1264, %v1072, 0.0
      %v1267 = vadd.f32 %v1265, %v1266
      %v1268 = vsel %vm1264, %v1073, 0.0
      %v1269 = vadd.f32 %v1267, %v1268
      %v1270 = vsel %vm1264, %v1074, 0.0
      %v1271 = vadd.f32 %v1269, %v1270
      %v1272 = vsel %vm1264, %v1075, 0.0
      %v1273 = vadd.f32 %v1271, %v1272
      %v1274 = vsel %vm1264, %v1076, 0.0
      %v1275 = vadd.f32 %v1273, %v1274
      %v1276 = vsel %vm1264, %v1077, 0.0
      %v1277 = vadd.f32 %v1275, %v1276
      %v1278 = vsel %vm1264, %v1078, 0.0
      %v1279 = vadd.f32 %v1277, %v1278
      %v1280 = vsel %vm1264, %v1079, 0.0
      %v1281 = vadd.f32 %v1279, %v1280
      %v1282 = vsel %vm1264, %v1080, 0.0
      %v1283 = vadd.f32 %v1281, %v1282
      %v1284 = vsel %vm1264, %v1081, 0.0
      %v1285 = vadd.f32 %v1283, %v1284
      %v1286 = vsel %vm1264, %v1082, 0.0
      %v1287 = vadd.f32 %v1285, %v1286
      %v1288 = vsel %vm1264, %v1083, 0.0
      %v1289 = vadd.f32 %v1287, %v1288
      %v1290 = vsel %vm1264, %v1084, 0.0
      %v1291 = vadd.f32 %v1289, %v1290
      %v1292 = vsel %vm1264, %v1085, 0.0
      %v1293 = vadd.f32 %v1291, %v1292
      %v1294 = vsel %vm1264, %v1086, 0.0
      %v1295 = vadd.f32 %v1293, %v1294
      %v1296 = vsel %vm1264, %v1087, 0.0
      %v1297 = vadd.f32 %v1295, %v1296
      %v1298 = vsel %vm1264, %v1088, 0.0
      %v1299 = vadd.f32 %v1297, %v1298
      %v1300 = vsel %vm1264, %v1089, 0.0
      %v1301 = vadd.f32 %v1299, %v1300
      %v1302 = vsel %vm1264, %v1090, 0.0
      %v1303 = vadd.f32 %v1301, %v1302
      %v1304 = vsel %vm1264, %v1091, 0.0
      %v1305 = vadd.f32 %v1303, %v1304
      %v1306 = vsel %vm1264, %v1092, 0.0
      %v1307 = vadd.f32 %v1305, %v1306
      %v1308 = vsel %vm1264, %v1093, 0.0
      %v1309 = vadd.f32 %v1307, %v1308
      %v1310 = vsel %vm1264, %v1094, 0.0
      %v1311 = vadd.f32 %v1309, %v1310
      %v1312 = vsel %vm1264, %v1095, 0.0
      %v1313 = vadd.f32 %v1311, %v1312
      %v1314 = vsel %vm1264, %v1096, 0.0
      %v1315 = vadd.f32 %v1313, %v1314
      %v1316 = vsel %vm1264, %v1097, 0.0
      %v1317 = vadd.f32 %v1315, %v1316
      %v1318 = vsel %vm1264, %v1098, 0.0
      %v1319 = vadd.f32 %v1317, %v1318
      %v1320 = vsel %vm1264, %v1099, 0.0
      %v1321 = vadd.f32 %v1319, %v1320
      %v1322 = vsel %vm1264, %v1100, 0.0
      %v1323 = vadd.f32 %v1321, %v1322
      %v1324 = vsel %vm1264, %v1101, 0.0
      %v1325 = vadd.f32 %v1323, %v1324
      %v1326 = vsel %vm1264, %v1102, 0.0
      %v1327 = vadd.f32 %v1325, %v1326
      %v1328 = vrot.slane %v1327, 4
      %v1329 = vadd.f32 %v1327, %v1328
      %v1330 = vrot.slane %v1329, 2
      %v1331 = vadd.f32 %v1329, %v1330
      %v1332 = vrot.slane %v1331, 1
      %v1333 = vadd.f32 %v1331, %v1332
      %vm1334 = vcmask 122880
      %1335 = vst.msk [vmem:[%s181] sm:$0x1] %vm1334, %v1333
      %v1336 = vmul.f32 %v1071, %v1071
      %v1337 = vmul.f32 %v1072, %v1072
      %v1338 = vmul.f32 %v1073, %v1073
      %v1339 = vmul.f32 %v1074, %v1074
      %v1340 = vmul.f32 %v1075, %v1075
      %v1341 = vmul.f32 %v1076, %v1076
      %v1342 = vmul.f32 %v1077, %v1077
      %v1343 = vmul.f32 %v1078, %v1078
      %v1344 = vmul.f32 %v1079, %v1079
      %v1345 = vmul.f32 %v1080, %v1080
      %v1346 = vmul.f32 %v1081, %v1081
      %v1347 = vmul.f32 %v1082, %v1082
      %v1348 = vmul.f32 %v1083, %v1083
      %v1349 = vmul.f32 %v1084, %v1084
      %v1350 = vmul.f32 %v1085, %v1085
      %v1351 = vmul.f32 %v1086, %v1086
      %v1352 = vmul.f32 %v1087, %v1087
      %v1353 = vmul.f32 %v1088, %v1088
      %v1354 = vmul.f32 %v1089, %v1089
      %v1355 = vmul.f32 %v1090, %v1090
      %v1356 = vmul.f32 %v1091, %v1091
      %v1357 = vmul.f32 %v1092, %v1092
      %v1358 = vmul.f32 %v1093, %v1093
      %v1359 = vmul.f32 %v1094, %v1094
      %v1360 = vmul.f32 %v1095, %v1095
      %v1361 = vmul.f32 %v1096, %v1096
      %v1362 = vmul.f32 %v1097, %v1097
      %v1363 = vmul.f32 %v1098, %v1098
      %v1364 = vmul.f32 %v1099, %v1099
      %v1365 = vmul.f32 %v1100, %v1100
      %v1366 = vmul.f32 %v1101, %v1101
      %v1367 = vmul.f32 %v1102, %v1102
      %v1368 = vsel %vm1264, %v1336, 0.0
      %v1369 = vsel %vm1264, %v1337, 0.0
      %v1370 = vadd.f32 %v1368, %v1369
      %v1371 = vsel %vm1264, %v1338, 0.0
      %v1372 = vadd.f32 %v1370, %v1371
      %v1373 = vsel %vm1264, %v1339, 0.0
      %v1374 = vadd.f32 %v1372, %v1373
      %v1375 = vsel %vm1264, %v1340, 0.0
      %v1376 = vadd.f32 %v1374, %v1375
      %v1377 = vsel %vm1264, %v1341, 0.0
      %v1378 = vadd.f32 %v1376, %v1377
      %v1379 = vsel %vm1264, %v1342, 0.0
      %v1380 = vadd.f32 %v1378, %v1379
      %v1381 = vsel %vm1264, %v1343, 0.0
      %v1382 = vadd.f32 %v1380, %v1381
      %v1383 = vsel %vm1264, %v1344, 0.0
      %v1384 = vadd.f32 %v1382, %v1383
      %v1385 = vsel %vm1264, %v1345, 0.0
      %v1386 = vadd.f32 %v1384, %v1385
      %v1387 = vsel %vm1264, %v1346, 0.0
      %v1388 = vadd.f32 %v1386, %v1387
      %v1389 = vsel %vm1264, %v1347, 0.0
      %v1390 = vadd.f32 %v1388, %v1389
      %v1391 = vsel %vm1264, %v1348, 0.0
      %v1392 = vadd.f32 %v1390, %v1391
      %v1393 = vsel %vm1264, %v1349, 0.0
      %v1394 = vadd.f32 %v1392, %v1393
      %v1395 = vsel %vm1264, %v1350, 0.0
      %v1396 = vadd.f32 %v1394, %v1395
      %v1397 = vsel %vm1264, %v1351, 0.0
      %v1398 = vadd.f32 %v1396, %v1397
      %v1399 = vsel %vm1264, %v1352, 0.0
      %v1400 = vadd.f32 %v1398, %v1399
      %v1401 = vsel %vm1264, %v1353, 0.0
      %v1402 = vadd.f32 %v1400, %v1401
      %v1403 = vsel %vm1264, %v1354, 0.0
      %v1404 = vadd.f32 %v1402, %v1403
      %v1405 = vsel %vm1264, %v1355, 0.0
      %v1406 = vadd.f32 %v1404, %v1405
      %v1407 = vsel %vm1264, %v1356, 0.0
      %v1408 = vadd.f32 %v1406, %v1407
      %v1409 = vsel %vm1264, %v1357, 0.0
      %v1410 = vadd.f32 %v1408, %v1409
      %v1411 = vsel %vm1264, %v1358, 0.0
      %v1412 = vadd.f32 %v1410, %v1411
      %v1413 = vsel %vm1264, %v1359, 0.0
      %v1414 = vadd.f32 %v1412, %v1413
      %v1415 = vsel %vm1264, %v1360, 0.0
      %v1416 = vadd.f32 %v1414, %v1415
      %v1417 = vsel %vm1264, %v1361, 0.0
      %v1418 = vadd.f32 %v1416, %v1417
      %v1419 = vsel %vm1264, %v1362, 0.0
      %v1420 = vadd.f32 %v1418, %v1419
      %v1421 = vsel %vm1264, %v1363, 0.0
      %v1422 = vadd.f32 %v1420, %v1421
      %v1423 = vsel %vm1264, %v1364, 0.0
      %v1424 = vadd.f32 %v1422, %v1423
      %v1425 = vsel %vm1264, %v1365, 0.0
      %v1426 = vadd.f32 %v1424, %v1425
      %v1427 = vsel %vm1264, %v1366, 0.0
      %v1428 = vadd.f32 %v1426, %v1427
      %v1429 = vsel %vm1264, %v1367, 0.0
      %v1430 = vadd.f32 %v1428, %v1429
      %v1431 = vrot.slane %v1430, 4
      %v1432 = vadd.f32 %v1430, %v1431
      %v1433 = vrot.slane %v1432, 2
      %v1434 = vadd.f32 %v1432, %v1433
      %v1435 = vrot.slane %v1434, 1
      %v1436 = vadd.f32 %v1434, %v1435
      %1437 = vst.msk [vmem:[%s181 + $0x1] sm:$0x1] %vm1334, %v1436
      %p1438 = scmp.lt.s32.totalorder %s15, 1
      %s1439 = scalar_select %p1438, %s15, 1
      %s1440 = smul.addr %s1439, 32
      %s1441 = smul.addr %s1440, 4
      %s1442 = scalar_lea.vmem %s2, %s1441
      %p1443 = scmp.lt.s32.totalorder %s15, 1
      %s1444 = scalar_select %p1443, %s15, 1
      %s1445 = smul.addr %s1444, 2
      %s1446 = scalar_lea.vmem %s3, %s1445
      // Predicated region
      $region29: #{cba_forward.1} parent=27 // pred_check
        %p1447 = pneg %p80
      $region30: #{cba_forward.1} parent=27 // pred_check_branch
        %1449 = sbr.rel (%p1447) target = $region32
      $region31: #{cba_forward.1} parent=27 // pred_region
        _
      $region32: #{cba_forward.1} parent=27 // pred_fallthru
        _
      // Predicated region
      $region33: #{cba_forward.1} parent=27 // pred_check
        %p1450 = pneg %p106
      $region34: #{cba_forward.1} parent=27 // pred_check_branch
        %1452 = sbr.rel (%p1450) target = $region36
      $region35: #{cba_forward.1} parent=27 // pred_region
        _
      $region36: #{cba_forward.1} parent=27 // pred_fallthru
        _
    $region28: #{cba_forward.1} parent=5 // pred_fallthru
      _
    %p1453 = scmp.le.s32.totalorder 2, %s10
    // Predicated region
    $region37: #{cba_forward.1} parent=5 // pred_check
      %p1454 = pneg %p1453
    $region38: #{cba_forward.1} parent=5 // pred_check_branch
      %1456 = sbr.rel (%p1454) target = $region40
    $region39: #{cba_forward.1} parent=5 // pred_region
      %s1457 = ssub.s32 %s10, 2
      // Predicated region
      $region41: #{cba_forward.1} parent=39 // pred_check
        %p1458 = pneg %p86
      $region42: #{cba_forward.1} parent=39 // pred_check_branch
        %1460 = sbr.rel (%p1458) target = $region44
      $region43: #{cba_forward.1} parent=39 // pred_region
        %p1461 = scmp.lt.s32.totalorder %s16, 1
        %s1462 = scalar_select %p1461, %s16, 1
        %s1463 = smul.addr %s1462, 32
        %s1464 = smul.addr %s1463, 4
        %s1465 = scalar_lea.vmem %s2, %s1464
      $region44: #{cba_forward.1} parent=39 // pred_fallthru
        _
      // Predicated region
      $region45: #{cba_forward.1} parent=39 // pred_check
        %p1466 = pneg %p112
      $region46: #{cba_forward.1} parent=39 // pred_check_branch
        %1468 = sbr.rel (%p1466) target = $region48
      $region47: #{cba_forward.1} parent=39 // pred_region
        %p1469 = scmp.lt.s32.totalorder %s16, 1
        %s1470 = scalar_select %p1469, %s16, 1
        %s1471 = smul.addr %s1470, 2
        %s1472 = scalar_lea.vmem %s3, %s1471
      $region48: #{cba_forward.1} parent=39 // pred_fallthru
        _
    $region40: #{cba_forward.1} parent=5 // pred_fallthru
      _
  $region6: #{cba_forward.1} parent=0 // loop_footer
    %s14 = sadd.s32 1, %s10
  $region7: #{cba_forward.1} parent=0 // loop_footer_branch
    %9 = sbr.rel target = $region3
  $region8: #{cba_forward.1} parent=0 // loop_exit
    _

</llo_original>
